<compile_context>
chip_gen: v7x
topology: tpu7x:2x2x1
jax: 0.10.0
libtpu: 0.0.40
codegen_flags: <defaults>
</compile_context>

<pallas_src>
import jax
import jax.numpy as jnp
from jax.experimental import pallas as pl
from jax.experimental.pallas import tpu as pltpu

EPS = 1e-5
C, HW, HIDDEN = 3, 25, 100      # channels, H*W, Linear width
K_IN = C * HW                   # 75
K_PAD = 128                     # padded fc1 contraction dim
H_PAD = 128                     # padded hidden width
N_MID = 7                       # fc2..fc8


def _round_up(n, m):
    return (n + m - 1) // m * m


def mlp_kernel(x_ref, w1_ref, wmid_ref, bstk_ref, w9_ref, b9_ref, o_ref):
    """One batch tile: InstanceNorm + 8x(Linear+ReLU) + Linear(->1)."""
    x = x_ref[...]                                             # (TB, 128) f32, cols >=75 are 0
    col = jax.lax.broadcasted_iota(jnp.int32, (1, K_PAD), 1)   # lane indices

    # InstanceNorm2d (affine=False): per-(row, channel) mean / biased var over
    # each 25-lane channel block of the flattened input.  Padded lanes stay 0.
    xn = jnp.zeros_like(x)
    for c in range(C):                                         # static, 3 iterations (VPU/XLU)
        m = (col >= c * HW) & (col < (c + 1) * HW)             # (1, 128) channel mask
        xc = jnp.where(m, x, 0.0)
        mean = jnp.sum(xc, axis=-1, keepdims=True) * (1.0 / HW)
        cen = jnp.where(m, x - mean, 0.0)
        var = jnp.sum(cen * cen, axis=-1, keepdims=True) * (1.0 / HW)
        xn = xn + cen * jax.lax.rsqrt(var + EPS)

    biases = bstk_ref[...]                                     # (8, 128), rows = b1..b8

    # fc1: single K=128 MXU contraction (flatten folded into w1 layout).
    h = jnp.dot(xn, w1_ref[...], preferred_element_type=jnp.float32)
    h = jnp.maximum(h + biases[0:1, :], 0.0)

    # fc2..fc8: Linear(128->128 padded) + ReLU, weights stacked in one ref.
    for i in range(N_MID):                                     # static unrolled, 7 iterations
        h = jnp.dot(h, wmid_ref[i], preferred_element_type=jnp.float32)
        h = jnp.maximum(h + biases[i + 1:i + 2, :], 0.0)

    # fc9 (100 -> 1): broadcast-mul + lane reduction on VPU/XLU (no MXU round-trip).
    o_ref[...] = (jnp.sum(h * w9_ref[...], axis=-1, keepdims=True)
                  + b9_ref[...])


def model_deep_forward(x_nchw, params, *, tb_max=256):
    """x_nchw: (B, 3, 5, 5) float32.  Returns (B, 1) float32."""
    B = x_nchw.shape[0]

    # Flatten NCHW -> (B, 75), pad lanes to 128 and batch to a sublane-aligned tile.
    x = x_nchw.reshape(B, K_IN).astype(jnp.float32)
    x = jnp.pad(x, ((0, 0), (0, K_PAD - K_IN)))
    Bp = _round_up(max(B, 1), 8)
    TB = Bp if Bp <= tb_max else tb_max
    Bp = _round_up(B, TB)
    if Bp != B:
        x = jnp.pad(x, ((0, Bp - B), (0, 0)))

    # Zero-padded, lane-dense parameters (weights stored as (in, out); transpose
    # first if porting real PyTorch nn.Linear weights, which are (out, in)).
    w1 = jnp.pad(params["w1"], ((0, K_PAD - K_IN), (0, H_PAD - HIDDEN)))
    wmid = jnp.pad(jnp.stack([params[f"w{i}"] for i in range(2, 9)]),
                   ((0, 0), (0, H_PAD - HIDDEN), (0, H_PAD - HIDDEN)))
    bstk = jnp.pad(jnp.concatenate([params[f"b{i}"] for i in range(1, 9)], axis=0),
                   ((0, 0), (0, H_PAD - HIDDEN)))
    w9 = jnp.pad(params["w9"].T, ((0, 0), (0, H_PAD - HIDDEN)))        # (1, 128)
    b9 = params["b9"].reshape(1, 1)

    grid = (Bp // TB,)
    out = pl.pallas_call(
        mlp_kernel,
        out_shape=jax.ShapeDtypeStruct((Bp, 1), jnp.float32),
        grid=grid,
        in_specs=[
            pl.BlockSpec((TB, K_PAD), lambda i: (i, 0)),               # x: tiled over batch
            pl.BlockSpec((K_PAD, H_PAD), lambda i: (0, 0)),            # w1: resident
            pl.BlockSpec((N_MID, H_PAD, H_PAD), lambda i: (0, 0, 0)),  # w2..w8 stack
            pl.BlockSpec((8, H_PAD), lambda i: (0, 0)),                # b1..b8 stack
            pl.BlockSpec((1, H_PAD), lambda i: (0, 0)),                # w9 row
            pl.BlockSpec((1, 1), lambda i: (0, 0)),                    # b9
        ],
        out_specs=pl.BlockSpec((TB, 1), lambda i: (i, 0)),
        compiler_params=pltpu.CompilerParams(
            dimension_semantics=("parallel",)),
    )(x, w1, wmid, bstk, w9, b9)
    return out[:B]


def init_params(key, gain_scale=0.1):
    """Xavier-uniform init, gain = gain_scale * sqrt(2) (module uses 0.1), biases 0."""
    gain = gain_scale * jnp.sqrt(2.0)
    dims = [(K_IN, HIDDEN)] + [(HIDDEN, HIDDEN)] * 7 + [(HIDDEN, 1)]
    params = {}
    for i, (fan_in, fan_out) in enumerate(dims, start=1):
        key, sub = jax.random.split(key)
        bound = gain * jnp.sqrt(6.0 / (fan_in + fan_out))
        params[f"w{i}"] = jax.random.uniform(
            sub, (fan_in, fan_out), jnp.float32, -bound, bound)
        params[f"b{i}"] = jnp.zeros((1, fan_out), jnp.float32)
    return params


def reference_forward(x_nchw, params):
    """Plain-JAX reference (HIGHEST precision matmuls) for correctness checking."""
    B = x_nchw.shape[0]
    x = x_nchw.reshape(B, C, HW).astype(jnp.float32)
    mean = jnp.mean(x, axis=-1, keepdims=True)
    var = jnp.mean(jnp.square(x - mean), axis=-1, keepdims=True)
    h = ((x - mean) * jax.lax.rsqrt(var + EPS)).reshape(B, K_IN)
    for i in range(1, 9):
        h = jnp.maximum(
            jnp.dot(h, params[f"w{i}"], precision=jax.lax.Precision.HIGHEST)
            + params[f"b{i}"], 0.0)
    return jnp.dot(h, params["w9"], precision=jax.lax.Precision.HIGHEST) + params["b9"]


if __name__ == "__main__":
    key = jax.random.PRNGKey(0)
    kx1, kx2, kp = jax.random.split(key, 3)

    # gain_scale=1.0 keeps activations O(1) so the numerical check is meaningful
    # (the module's own init uses 0.1, which drives outputs to ~1e-9).
    params = init_params(kp, gain_scale=1.0)

    # Small case (B=2, single tile) and a multi-tile case (B=300 -> grid=(2,)).
    for kk, B in ((kx1, 2), (kx2, 300)):
        x = jax.random.normal(kk, (B, 3, 5, 5), jnp.float32)   # NCHW, as in PyTorch
        out = jax.block_until_ready(model_deep_forward(x, params))
        ref = reference_forward(x, params)
        assert out.shape == (B, 1)
        assert bool(jnp.all(jnp.isfinite(out)))
        assert jnp.allclose(out, ref, atol=1e-3, rtol=1e-2), (
            float(jnp.max(jnp.abs(out - ref))))

    print("KERNEL_OK")
</pallas_src>

<mosaic_0001>
module attributes {stable_mosaic.version = 11 : i64} {
  func.func @mlp_kernel(%arg0: i32, %arg1: memref<8x128xf32, #tpu.memory_space<vmem>>, %arg2: memref<128x128xf32, #tpu.memory_space<vmem>>, %arg3: memref<7x128x128xf32, #tpu.memory_space<vmem>>, %arg4: memref<8x128xf32, #tpu.memory_space<vmem>>, %arg5: memref<1x128xf32, #tpu.memory_space<vmem>>, %arg6: memref<1x1xf32, #tpu.memory_space<vmem>>, %arg7: memref<8x1xf32, #tpu.memory_space<vmem>>) attributes {dimension_semantics = [#tpu.dimension_semantics<parallel>], iteration_bounds = array<i64: 1>, scalar_prefetch = 0 : i64, scratch_operands = 0 : i64, tpu.core_type = #tpu.core_type<tc>, window_params = [{transform_indices = @transform_0, window_bounds = array<i64: 8, 128>}, {pipeline_mode = #tpu.pipeline_mode<synchronous>, transform_indices = @transform_1, window_bounds = array<i64: 128, 128>}, {pipeline_mode = #tpu.pipeline_mode<synchronous>, transform_indices = @transform_2, window_bounds = array<i64: 7, 128, 128>}, {pipeline_mode = #tpu.pipeline_mode<synchronous>, transform_indices = @transform_3, window_bounds = array<i64: 8, 128>}, {pipeline_mode = #tpu.pipeline_mode<synchronous>, transform_indices = @transform_4, window_bounds = array<i64: 1, 128>}, {pipeline_mode = #tpu.pipeline_mode<synchronous>, transform_indices = @transform_5, window_bounds = array<i64: 1, 1>}, {transform_indices = @transform_6, window_bounds = array<i64: 8, 1>}]} {
    %c0 = arith.constant 0 : index
    %c0_0 = arith.constant 0 : index
    %0 = vector.load %arg1[%c0, %c0_0] : memref<8x128xf32, #tpu.memory_space<vmem>>, vector<8x128xf32>
    %1 = tpu.iota {dimensions = array<i32: 1>} : vector<1x128xi32>
    %cst = arith.constant 0.000000e+00 : f32
    %2 = vector.broadcast %cst : f32 to vector<8x128xf32>
    %c0_i32 = arith.constant 0 : i32
    %3 = vector.broadcast %c0_i32 : i32 to vector<1x128xi32>
    %4 = arith.cmpi sge, %1, %3 : vector<1x128xi32>
    %c25_i32 = arith.constant 25 : i32
    %5 = vector.broadcast %c25_i32 : i32 to vector<1x128xi32>
    %6 = arith.cmpi slt, %1, %5 : vector<1x128xi32>
    %7 = arith.andi %4, %6 : vector<1x128xi1>
    %cst_1 = arith.constant 0.000000e+00 : f32
    %8 = vector.shape_cast %7 : vector<1x128xi1> to vector<1x128xi1>
    %9 = vector.broadcast %8 : vector<1x128xi1> to vector<8x128xi1>
    %10 = vector.broadcast %cst_1 : f32 to vector<8x128xf32>
    %11 = arith.select %9, %0, %10 : vector<8x128xi1>, vector<8x128xf32>
    %cst_2 = arith.constant dense<0.000000e+00> : vector<8xf32>
    %12 = vector.multi_reduction <add>, %11, %cst_2 [1] : vector<8x128xf32> to vector<8xf32>
    %13 = vector.shape_cast %12 : vector<8xf32> to vector<8x1xf32>
    %cst_3 = arith.constant 4.000000e-02 : f32
    %14 = vector.broadcast %cst_3 : f32 to vector<8x1xf32>
    %15 = arith.mulf %13, %14 : vector<8x1xf32>
    %16 = vector.broadcast %15 : vector<8x1xf32> to vector<8x128xf32>
    %17 = arith.subf %0, %16 : vector<8x128xf32>
    %cst_4 = arith.constant 0.000000e+00 : f32
    %18 = vector.shape_cast %7 : vector<1x128xi1> to vector<1x128xi1>
    %19 = vector.broadcast %18 : vector<1x128xi1> to vector<8x128xi1>
    %20 = vector.broadcast %cst_4 : f32 to vector<8x128xf32>
    %21 = arith.select %19, %17, %20 : vector<8x128xi1>, vector<8x128xf32>
    %22 = arith.mulf %21, %21 : vector<8x128xf32>
    %cst_5 = arith.constant dense<0.000000e+00> : vector<8xf32>
    %23 = vector.multi_reduction <add>, %22, %cst_5 [1] : vector<8x128xf32> to vector<8xf32>
    %24 = vector.shape_cast %23 : vector<8xf32> to vector<8x1xf32>
    %cst_6 = arith.constant 4.000000e-02 : f32
    %25 = vector.broadcast %cst_6 : f32 to vector<8x1xf32>
    %26 = arith.mulf %24, %25 : vector<8x1xf32>
    %cst_7 = arith.constant 9.99999974E-6 : f32
    %27 = vector.broadcast %cst_7 : f32 to vector<8x1xf32>
    %28 = arith.addf %26, %27 : vector<8x1xf32>
    %29 = math.rsqrt %28 : vector<8x1xf32>
    %30 = vector.broadcast %29 : vector<8x1xf32> to vector<8x128xf32>
    %31 = arith.mulf %21, %30 : vector<8x128xf32>
    %32 = arith.addf %2, %31 : vector<8x128xf32>
    %c25_i32_8 = arith.constant 25 : i32
    %33 = vector.broadcast %c25_i32_8 : i32 to vector<1x128xi32>
    %34 = arith.cmpi sge, %1, %33 : vector<1x128xi32>
    %c50_i32 = arith.constant 50 : i32
    %35 = vector.broadcast %c50_i32 : i32 to vector<1x128xi32>
    %36 = arith.cmpi slt, %1, %35 : vector<1x128xi32>
    %37 = arith.andi %34, %36 : vector<1x128xi1>
    %cst_9 = arith.constant 0.000000e+00 : f32
    %38 = vector.shape_cast %37 : vector<1x128xi1> to vector<1x128xi1>
    %39 = vector.broadcast %38 : vector<1x128xi1> to vector<8x128xi1>
    %40 = vector.broadcast %cst_9 : f32 to vector<8x128xf32>
    %41 = arith.select %39, %0, %40 : vector<8x128xi1>, vector<8x128xf32>
    %cst_10 = arith.constant dense<0.000000e+00> : vector<8xf32>
    %42 = vector.multi_reduction <add>, %41, %cst_10 [1] : vector<8x128xf32> to vector<8xf32>
    %43 = vector.shape_cast %42 : vector<8xf32> to vector<8x1xf32>
    %cst_11 = arith.constant 4.000000e-02 : f32
    %44 = vector.broadcast %cst_11 : f32 to vector<8x1xf32>
    %45 = arith.mulf %43, %44 : vector<8x1xf32>
    %46 = vector.broadcast %45 : vector<8x1xf32> to vector<8x128xf32>
    %47 = arith.subf %0, %46 : vector<8x128xf32>
    %cst_12 = arith.constant 0.000000e+00 : f32
    %48 = vector.shape_cast %37 : vector<1x128xi1> to vector<1x128xi1>
    %49 = vector.broadcast %48 : vector<1x128xi1> to vector<8x128xi1>
    %50 = vector.broadcast %cst_12 : f32 to vector<8x128xf32>
    %51 = arith.select %49, %47, %50 : vector<8x128xi1>, vector<8x128xf32>
    %52 = arith.mulf %51, %51 : vector<8x128xf32>
    %cst_13 = arith.constant dense<0.000000e+00> : vector<8xf32>
    %53 = vector.multi_reduction <add>, %52, %cst_13 [1] : vector<8x128xf32> to vector<8xf32>
    %54 = vector.shape_cast %53 : vector<8xf32> to vector<8x1xf32>
    %cst_14 = arith.constant 4.000000e-02 : f32
    %55 = vector.broadcast %cst_14 : f32 to vector<8x1xf32>
    %56 = arith.mulf %54, %55 : vector<8x1xf32>
    %cst_15 = arith.constant 9.99999974E-6 : f32
    %57 = vector.broadcast %cst_15 : f32 to vector<8x1xf32>
    %58 = arith.addf %56, %57 : vector<8x1xf32>
    %59 = math.rsqrt %58 : vector<8x1xf32>
    %60 = vector.broadcast %59 : vector<8x1xf32> to vector<8x128xf32>
    %61 = arith.mulf %51, %60 : vector<8x128xf32>
    %62 = arith.addf %32, %61 : vector<8x128xf32>
    %c50_i32_16 = arith.constant 50 : i32
    %63 = vector.broadcast %c50_i32_16 : i32 to vector<1x128xi32>
    %64 = arith.cmpi sge, %1, %63 : vector<1x128xi32>
    %c75_i32 = arith.constant 75 : i32
    %65 = vector.broadcast %c75_i32 : i32 to vector<1x128xi32>
    %66 = arith.cmpi slt, %1, %65 : vector<1x128xi32>
    %67 = arith.andi %64, %66 : vector<1x128xi1>
    %cst_17 = arith.constant 0.000000e+00 : f32
    %68 = vector.shape_cast %67 : vector<1x128xi1> to vector<1x128xi1>
    %69 = vector.broadcast %68 : vector<1x128xi1> to vector<8x128xi1>
    %70 = vector.broadcast %cst_17 : f32 to vector<8x128xf32>
    %71 = arith.select %69, %0, %70 : vector<8x128xi1>, vector<8x128xf32>
    %cst_18 = arith.constant dense<0.000000e+00> : vector<8xf32>
    %72 = vector.multi_reduction <add>, %71, %cst_18 [1] : vector<8x128xf32> to vector<8xf32>
    %73 = vector.shape_cast %72 : vector<8xf32> to vector<8x1xf32>
    %cst_19 = arith.constant 4.000000e-02 : f32
    %74 = vector.broadcast %cst_19 : f32 to vector<8x1xf32>
    %75 = arith.mulf %73, %74 : vector<8x1xf32>
    %76 = vector.broadcast %75 : vector<8x1xf32> to vector<8x128xf32>
    %77 = arith.subf %0, %76 : vector<8x128xf32>
    %cst_20 = arith.constant 0.000000e+00 : f32
    %78 = vector.shape_cast %67 : vector<1x128xi1> to vector<1x128xi1>
    %79 = vector.broadcast %78 : vector<1x128xi1> to vector<8x128xi1>
    %80 = vector.broadcast %cst_20 : f32 to vector<8x128xf32>
    %81 = arith.select %79, %77, %80 : vector<8x128xi1>, vector<8x128xf32>
    %82 = arith.mulf %81, %81 : vector<8x128xf32>
    %cst_21 = arith.constant dense<0.000000e+00> : vector<8xf32>
    %83 = vector.multi_reduction <add>, %82, %cst_21 [1] : vector<8x128xf32> to vector<8xf32>
    %84 = vector.shape_cast %83 : vector<8xf32> to vector<8x1xf32>
    %cst_22 = arith.constant 4.000000e-02 : f32
    %85 = vector.broadcast %cst_22 : f32 to vector<8x1xf32>
    %86 = arith.mulf %84, %85 : vector<8x1xf32>
    %cst_23 = arith.constant 9.99999974E-6 : f32
    %87 = vector.broadcast %cst_23 : f32 to vector<8x1xf32>
    %88 = arith.addf %86, %87 : vector<8x1xf32>
    %89 = math.rsqrt %88 : vector<8x1xf32>
    %90 = vector.broadcast %89 : vector<8x1xf32> to vector<8x128xf32>
    %91 = arith.mulf %81, %90 : vector<8x128xf32>
    %92 = arith.addf %62, %91 : vector<8x128xf32>
    %c0_24 = arith.constant 0 : index
    %c0_25 = arith.constant 0 : index
    %93 = vector.load %arg4[%c0_24, %c0_25] : memref<8x128xf32, #tpu.memory_space<vmem>>, vector<8x128xf32>
    %c0_26 = arith.constant 0 : index
    %c0_27 = arith.constant 0 : index
    %94 = vector.load %arg2[%c0_26, %c0_27] : memref<128x128xf32, #tpu.memory_space<vmem>>, vector<128x128xf32>
    %cst_28 = arith.constant dense<0.000000e+00> : vector<8x128xf32>
    %95 = tpu.matmul %92, %94, %cst_28 {dimension_numbers = #tpu.dot_dimension_numbers<[1], [0], [0], [1], [0, 0, 1, 1], [], []>} : vector<8x128xf32>, vector<128x128xf32>, vector<8x128xf32> -> vector<8x128xf32>
    %96 = vector.extract_strided_slice %93 {offsets = [0, 0], sizes = [1, 128], strides = [1, 1]} : vector<8x128xf32> to vector<1x128xf32>
    %97 = vector.broadcast %96 : vector<1x128xf32> to vector<8x128xf32>
    %98 = arith.addf %95, %97 : vector<8x128xf32>
    %cst_29 = arith.constant 0.000000e+00 : f32
    %99 = vector.broadcast %cst_29 : f32 to vector<8x128xf32>
    %100 = arith.maximumf %98, %99 : vector<8x128xf32>
    %c0_30 = arith.constant 0 : index
    %c0_31 = arith.constant 0 : index
    %c0_32 = arith.constant 0 : index
    %101 = vector.load %arg3[%c0_30, %c0_31, %c0_32] : memref<7x128x128xf32, #tpu.memory_space<vmem>>, vector<1x128x128xf32>
    %102 = vector.shape_cast %101 : vector<1x128x128xf32> to vector<128x128xf32>
    %cst_33 = arith.constant dense<0.000000e+00> : vector<8x128xf32>
    %103 = tpu.matmul %100, %102, %cst_33 {dimension_numbers = #tpu.dot_dimension_numbers<[1], [0], [0], [1], [0, 0, 1, 1], [], []>} : vector<8x128xf32>, vector<128x128xf32>, vector<8x128xf32> -> vector<8x128xf32>
    %104 = vector.extract_strided_slice %93 {offsets = [1, 0], sizes = [1, 128], strides = [1, 1]} : vector<8x128xf32> to vector<1x128xf32>
    %105 = vector.broadcast %104 : vector<1x128xf32> to vector<8x128xf32>
    %106 = arith.addf %103, %105 : vector<8x128xf32>
    %cst_34 = arith.constant 0.000000e+00 : f32
    %107 = vector.broadcast %cst_34 : f32 to vector<8x128xf32>
    %108 = arith.maximumf %106, %107 : vector<8x128xf32>
    %c1 = arith.constant 1 : index
    %c0_35 = arith.constant 0 : index
    %c0_36 = arith.constant 0 : index
    %109 = vector.load %arg3[%c1, %c0_35, %c0_36] : memref<7x128x128xf32, #tpu.memory_space<vmem>>, vector<1x128x128xf32>
    %110 = vector.shape_cast %109 : vector<1x128x128xf32> to vector<128x128xf32>
    %cst_37 = arith.constant dense<0.000000e+00> : vector<8x128xf32>
    %111 = tpu.matmul %108, %110, %cst_37 {dimension_numbers = #tpu.dot_dimension_numbers<[1], [0], [0], [1], [0, 0, 1, 1], [], []>} : vector<8x128xf32>, vector<128x128xf32>, vector<8x128xf32> -> vector<8x128xf32>
    %112 = vector.extract_strided_slice %93 {offsets = [2, 0], sizes = [1, 128], strides = [1, 1]} : vector<8x128xf32> to vector<1x128xf32>
    %113 = vector.broadcast %112 : vector<1x128xf32> to vector<8x128xf32>
    %114 = arith.addf %111, %113 : vector<8x128xf32>
    %cst_38 = arith.constant 0.000000e+00 : f32
    %115 = vector.broadcast %cst_38 : f32 to vector<8x128xf32>
    %116 = arith.maximumf %114, %115 : vector<8x128xf32>
    %c2 = arith.constant 2 : index
    %c0_39 = arith.constant 0 : index
    %c0_40 = arith.constant 0 : index
    %117 = vector.load %arg3[%c2, %c0_39, %c0_40] : memref<7x128x128xf32, #tpu.memory_space<vmem>>, vector<1x128x128xf32>
    %118 = vector.shape_cast %117 : vector<1x128x128xf32> to vector<128x128xf32>
    %cst_41 = arith.constant dense<0.000000e+00> : vector<8x128xf32>
    %119 = tpu.matmul %116, %118, %cst_41 {dimension_numbers = #tpu.dot_dimension_numbers<[1], [0], [0], [1], [0, 0, 1, 1], [], []>} : vector<8x128xf32>, vector<128x128xf32>, vector<8x128xf32> -> vector<8x128xf32>
    %120 = vector.extract_strided_slice %93 {offsets = [3, 0], sizes = [1, 128], strides = [1, 1]} : vector<8x128xf32> to vector<1x128xf32>
    %121 = vector.broadcast %120 : vector<1x128xf32> to vector<8x128xf32>
    %122 = arith.addf %119, %121 : vector<8x128xf32>
    %cst_42 = arith.constant 0.000000e+00 : f32
    %123 = vector.broadcast %cst_42 : f32 to vector<8x128xf32>
    %124 = arith.maximumf %122, %123 : vector<8x128xf32>
    %c3 = arith.constant 3 : index
    %c0_43 = arith.constant 0 : index
    %c0_44 = arith.constant 0 : index
    %125 = vector.load %arg3[%c3, %c0_43, %c0_44] : memref<7x128x128xf32, #tpu.memory_space<vmem>>, vector<1x128x128xf32>
    %126 = vector.shape_cast %125 : vector<1x128x128xf32> to vector<128x128xf32>
    %cst_45 = arith.constant dense<0.000000e+00> : vector<8x128xf32>
    %127 = tpu.matmul %124, %126, %cst_45 {dimension_numbers = #tpu.dot_dimension_numbers<[1], [0], [0], [1], [0, 0, 1, 1], [], []>} : vector<8x128xf32>, vector<128x128xf32>, vector<8x128xf32> -> vector<8x128xf32>
    %128 = vector.extract_strided_slice %93 {offsets = [4, 0], sizes = [1, 128], strides = [1, 1]} : vector<8x128xf32> to vector<1x128xf32>
    %129 = vector.broadcast %128 : vector<1x128xf32> to vector<8x128xf32>
    %130 = arith.addf %127, %129 : vector<8x128xf32>
    %cst_46 = arith.constant 0.000000e+00 : f32
    %131 = vector.broadcast %cst_46 : f32 to vector<8x128xf32>
    %132 = arith.maximumf %130, %131 : vector<8x128xf32>
    %c4 = arith.constant 4 : index
    %c0_47 = arith.constant 0 : index
    %c0_48 = arith.constant 0 : index
    %133 = vector.load %arg3[%c4, %c0_47, %c0_48] : memref<7x128x128xf32, #tpu.memory_space<vmem>>, vector<1x128x128xf32>
    %134 = vector.shape_cast %133 : vector<1x128x128xf32> to vector<128x128xf32>
    %cst_49 = arith.constant dense<0.000000e+00> : vector<8x128xf32>
    %135 = tpu.matmul %132, %134, %cst_49 {dimension_numbers = #tpu.dot_dimension_numbers<[1], [0], [0], [1], [0, 0, 1, 1], [], []>} : vector<8x128xf32>, vector<128x128xf32>, vector<8x128xf32> -> vector<8x128xf32>
    %136 = vector.extract_strided_slice %93 {offsets = [5, 0], sizes = [1, 128], strides = [1, 1]} : vector<8x128xf32> to vector<1x128xf32>
    %137 = vector.broadcast %136 : vector<1x128xf32> to vector<8x128xf32>
    %138 = arith.addf %135, %137 : vector<8x128xf32>
    %cst_50 = arith.constant 0.000000e+00 : f32
    %139 = vector.broadcast %cst_50 : f32 to vector<8x128xf32>
    %140 = arith.maximumf %138, %139 : vector<8x128xf32>
    %c5 = arith.constant 5 : index
    %c0_51 = arith.constant 0 : index
    %c0_52 = arith.constant 0 : index
    %141 = vector.load %arg3[%c5, %c0_51, %c0_52] : memref<7x128x128xf32, #tpu.memory_space<vmem>>, vector<1x128x128xf32>
    %142 = vector.shape_cast %141 : vector<1x128x128xf32> to vector<128x128xf32>
    %cst_53 = arith.constant dense<0.000000e+00> : vector<8x128xf32>
    %143 = tpu.matmul %140, %142, %cst_53 {dimension_numbers = #tpu.dot_dimension_numbers<[1], [0], [0], [1], [0, 0, 1, 1], [], []>} : vector<8x128xf32>, vector<128x128xf32>, vector<8x128xf32> -> vector<8x128xf32>
    %144 = vector.extract_strided_slice %93 {offsets = [6, 0], sizes = [1, 128], strides = [1, 1]} : vector<8x128xf32> to vector<1x128xf32>
    %145 = vector.broadcast %144 : vector<1x128xf32> to vector<8x128xf32>
    %146 = arith.addf %143, %145 : vector<8x128xf32>
    %cst_54 = arith.constant 0.000000e+00 : f32
    %147 = vector.broadcast %cst_54 : f32 to vector<8x128xf32>
    %148 = arith.maximumf %146, %147 : vector<8x128xf32>
    %c6 = arith.constant 6 : index
    %c0_55 = arith.constant 0 : index
    %c0_56 = arith.constant 0 : index
    %149 = vector.load %arg3[%c6, %c0_55, %c0_56] : memref<7x128x128xf32, #tpu.memory_space<vmem>>, vector<1x128x128xf32>
    %150 = vector.shape_cast %149 : vector<1x128x128xf32> to vector<128x128xf32>
    %cst_57 = arith.constant dense<0.000000e+00> : vector<8x128xf32>
    %151 = tpu.matmul %148, %150, %cst_57 {dimension_numbers = #tpu.dot_dimension_numbers<[1], [0], [0], [1], [0, 0, 1, 1], [], []>} : vector<8x128xf32>, vector<128x128xf32>, vector<8x128xf32> -> vector<8x128xf32>
    %152 = vector.extract_strided_slice %93 {offsets = [7, 0], sizes = [1, 128], strides = [1, 1]} : vector<8x128xf32> to vector<1x128xf32>
    %153 = vector.broadcast %152 : vector<1x128xf32> to vector<8x128xf32>
    %154 = arith.addf %151, %153 : vector<8x128xf32>
    %cst_58 = arith.constant 0.000000e+00 : f32
    %155 = vector.broadcast %cst_58 : f32 to vector<8x128xf32>
    %156 = arith.maximumf %154, %155 : vector<8x128xf32>
    %c0_59 = arith.constant 0 : index
    %c0_60 = arith.constant 0 : index
    %157 = vector.load %arg5[%c0_59, %c0_60] : memref<1x128xf32, #tpu.memory_space<vmem>>, vector<1x128xf32>
    %158 = vector.broadcast %157 : vector<1x128xf32> to vector<8x128xf32>
    %159 = arith.mulf %156, %158 : vector<8x128xf32>
    %cst_61 = arith.constant dense<0.000000e+00> : vector<8xf32>
    %160 = vector.multi_reduction <add>, %159, %cst_61 [1] : vector<8x128xf32> to vector<8xf32>
    %161 = vector.shape_cast %160 : vector<8xf32> to vector<8x1xf32>
    %c0_62 = arith.constant 0 : index
    %c0_63 = arith.constant 0 : index
    %162 = vector.load %arg6[%c0_62, %c0_63] : memref<1x1xf32, #tpu.memory_space<vmem>>, vector<1x1xf32>
    %163 = vector.broadcast %162 : vector<1x1xf32> to vector<8x1xf32>
    %164 = arith.addf %161, %163 : vector<8x1xf32>
    %c0_64 = arith.constant 0 : index
    %c0_65 = arith.constant 0 : index
    %165 = vector.load %arg7[%c0_64, %c0_65] : memref<8x1xf32, #tpu.memory_space<vmem>>, vector<8x1xf32>
    tpu.vector_store %arg7[%c0_64, %c0_65], %164 {strides = array<i32>} : memref<8x1xf32, #tpu.memory_space<vmem>>, vector<8x1xf32>,
    return
  }
  func.func @transform_0(%arg0: i32) -> (i32, i32) {
    %c0_i32 = arith.constant 0 : i32
    %c0_i32_0 = arith.constant 0 : i32
    return %arg0, %c0_i32 : i32, i32
  }
  func.func @transform_1(%arg0: i32) -> (i32, i32) {
    %c0_i32 = arith.constant 0 : i32
    %c0_i32_0 = arith.constant 0 : i32
    %c0_i32_1 = arith.constant 0 : i32
    return %c0_i32, %c0_i32_0 : i32, i32
  }
  func.func @transform_2(%arg0: i32) -> (i32, i32, i32) {
    %c0_i32 = arith.constant 0 : i32
    %c0_i32_0 = arith.constant 0 : i32
    %c0_i32_1 = arith.constant 0 : i32
    %c0_i32_2 = arith.constant 0 : i32
    return %c0_i32, %c0_i32_0, %c0_i32_1 : i32, i32, i32
  }
  func.func @transform_3(%arg0: i32) -> (i32, i32) {
    %c0_i32 = arith.constant 0 : i32
    %c0_i32_0 = arith.constant 0 : i32
    %c0_i32_1 = arith.constant 0 : i32
    return %c0_i32, %c0_i32_0 : i32, i32
  }
  func.func @transform_4(%arg0: i32) -> (i32, i32) {
    %c0_i32 = arith.constant 0 : i32
    %c0_i32_0 = arith.constant 0 : i32
    %c0_i32_1 = arith.constant 0 : i32
    return %c0_i32, %c0_i32_0 : i32, i32
  }
  func.func @transform_5(%arg0: i32) -> (i32, i32) {
    %c0_i32 = arith.constant 0 : i32
    %c0_i32_0 = arith.constant 0 : i32
    %c0_i32_1 = arith.constant 0 : i32
    return %c0_i32, %c0_i32_0 : i32, i32
  }
  func.func @transform_6(%arg0: i32) -> (i32, i32) {
    %c0_i32 = arith.constant 0 : i32
    %c0_i32_0 = arith.constant 0 : i32
    return %arg0, %c0_i32 : i32, i32
  }
}

</mosaic_0001>

<llo_original>
// kernel: tpu_custom_call.1
$region0: #{tpu_custom_call.1}
  #allocation0 [shape = 'u32[]', space=smem, size = 0x4, offset = 0x4, fixed_abs, tag = 'smem constant byte address 0x4 - core index']
  #allocation1 [shape = 'u32[144,128]{1,0:T(1,128)}', space=vmem, size = 0x12000, scoped, tag = 'internal scratch']
  #allocation2 [shape = 'f32[1,1]{1,0:T(1,128)S(1)}', space=vmem, size = 0x200, scoped, tag = 'scoped memory for tpu_custom_call.1']
  %s0 = inlined_call_operand.hbm [shape: f32[8,128], index: 0, kind: input, shape index: {}]
  %s1 = inlined_call_operand.hbm [shape: f32[128,128], index: 1, kind: input, shape index: {}]
  %s2 = inlined_call_operand.hbm [shape: f32[7,128,128], index: 2, kind: input, shape index: {}]
  %s3 = inlined_call_operand.vmem [shape: f32[8,128], index: 3, kind: input, shape index: {}]
  %s4 = inlined_call_operand.vmem [shape: f32[1,128], index: 4, kind: input, shape index: {}]
  %s5 = inlined_call_operand.<no memory space> [shape: f32[1,1], index: 5, kind: input, shape index: {}]
  %s6 = inlined_call_operand.vmem [shape: f32[8,1], index: 6, kind: output, shape index: {}]
  %s7 = sld [smem:[#allocation0]]
  $region46: #{tpu_custom_call.1} parent=0
    _
  %s9 = ssub.s32 1, %s7
  %s10 = scalar_select 0, %s9, %s7
  %v11 = vstv %s5
  %12 = vst [vmem:[#allocation2] sm:$0x1] %v11
  $region1: #{tpu_custom_call.1} parent=0
    #allocation3 [shape = 'u8[4096]{0}', space=vmem, size = 0x1000, scoped, tag = 'input window, operand 0, single buffered']
    #allocation4 [shape = 's32[1]{0}', space=sflag, size = 0x4, scoped, tag = 'scoped memory for tpu_custom_call.1']
    #allocation5 [shape = 'u8[65536]{0}', space=vmem, size = 0x10000, scoped, tag = 'input window, operand 1, single buffered']
    #allocation6 [shape = 's32[1]{0}', space=sflag, size = 0x4, scoped, tag = 'scoped memory for tpu_custom_call.1']
    #allocation7 [shape = 'u8[458752]{0}', space=vmem, size = 0x70000, scoped, tag = 'input window, operand 2, single buffered']
    %13 = vsyncpa [#allocation4], 0
    %14 = vsyncpa [#allocation6], 0
    // Predicated region
    $region2: #{tpu_custom_call.1} parent=1 // pred_check
      _
    $region3: #{tpu_custom_call.1} parent=1 // pred_check_branch
      %16 = sbr.rel (0) target = $region5
    $region4: #{tpu_custom_call.1} parent=1 // pred_region
      %s18 = ssub.s32 128, 128
      %19 = vsyncadd [#allocation4], %s18
      %s21 = sshll.u32 [#allocation3], 4
      %s22 = int_to_ptr.vmem [resolvable:$true] %s21
      %24 = dma.hbm_to_vmem [thread:$0]  %s0, 128, %s22, [#allocation4]
    $region5: #{tpu_custom_call.1} parent=1 // pred_fallthru
      _
    // Predicated region
    $region6: #{tpu_custom_call.1} parent=1 // pred_check
      _
    $region7: #{tpu_custom_call.1} parent=1 // pred_check_branch
      %26 = sbr.rel (0) target = $region9
    $region8: #{tpu_custom_call.1} parent=1 // pred_region
      %s28 = ssub.s32 2048, 2048
      %29 = vsyncadd [#allocation6], %s28
      %s30 = sshll.u32 [#allocation5], 4
      %s31 = int_to_ptr.vmem [resolvable:$true] %s30
      %36 = dma.hbm_to_vmem [thread:$0]  %s1, 2048, %s31, [#allocation6], 128, 128, 8
    $region9: #{tpu_custom_call.1} parent=1 // pred_fallthru
      _
    // Predicated region
    $region10: #{tpu_custom_call.1} parent=1 // pred_check
      _
    $region11: #{tpu_custom_call.1} parent=1 // pred_check_branch
      %38 = sbr.rel (0) target = $region13
    $region12: #{tpu_custom_call.1} parent=1 // pred_region
      %s40 = ssub.s32 14336, 14336
      %41 = vsyncadd [#allocation6], %s40
      %s42 = sshll.u32 [#allocation7], 4
      %s43 = int_to_ptr.vmem [resolvable:$true] %s42
      %48 = dma.hbm_to_vmem [thread:$0]  %s2, 14336, %s43, [#allocation6], 128, 128, 8
    $region13: #{tpu_custom_call.1} parent=1 // pred_fallthru
      _
    // Predicated region
    $region14: #{tpu_custom_call.1} parent=1 // pred_check
      _
    $region15: #{tpu_custom_call.1} parent=1 // pred_check_branch
      %50 = sbr.rel (0) target = $region17
    $region16: #{tpu_custom_call.1} parent=1 // pred_region
      _
    $region17: #{tpu_custom_call.1} parent=1 // pred_fallthru
      _
    // Predicated region
    $region18: #{tpu_custom_call.1} parent=1 // pred_check
      _
    $region19: #{tpu_custom_call.1} parent=1 // pred_check_branch
      %52 = sbr.rel (0) target = $region21
    $region20: #{tpu_custom_call.1} parent=1 // pred_region
      _
    $region21: #{tpu_custom_call.1} parent=1 // pred_fallthru
      _
    // Predicated region
    $region22: #{tpu_custom_call.1} parent=1 // pred_check
      _
    $region23: #{tpu_custom_call.1} parent=1 // pred_check_branch
      %54 = sbr.rel (0) target = $region25
    $region24: #{tpu_custom_call.1} parent=1 // pred_region
      _
    $region25: #{tpu_custom_call.1} parent=1 // pred_fallthru
      _
    // Predicated region
    $region26: #{tpu_custom_call.1} parent=1 // pred_check
      _
    $region27: #{tpu_custom_call.1} parent=1 // pred_check_branch
      %56 = sbr.rel (0) target = $region29
    $region28: #{tpu_custom_call.1} parent=1 // pred_region
      %57 = dma.done [#allocation4], 128
    $region29: #{tpu_custom_call.1} parent=1 // pred_fallthru
      _
    // Predicated region
    $region30: #{tpu_custom_call.1} parent=1 // pred_check
      _
    $region31: #{tpu_custom_call.1} parent=1 // pred_check_branch
      %59 = sbr.rel (0) target = $region33
    $region32: #{tpu_custom_call.1} parent=1 // pred_region
      %60 = dma.done [#allocation6], 2048
    $region33: #{tpu_custom_call.1} parent=1 // pred_fallthru
      _
    // Predicated region
    $region34: #{tpu_custom_call.1} parent=1 // pred_check
      _
    $region35: #{tpu_custom_call.1} parent=1 // pred_check_branch
      %62 = sbr.rel (0) target = $region37
    $region36: #{tpu_custom_call.1} parent=1 // pred_region
      %63 = dma.done [#allocation6], 14336
    $region37: #{tpu_custom_call.1} parent=1 // pred_fallthru
      _
    %v64 = vld [vmem:[#allocation3] sm:$0xff]
    %v65 = vlaneseq
    %v66 = vand.u32 %v65, 127
    %vm67 = vcmp.ge.s32.totalorder %v66, 0
    %vm68 = vcmp.lt.s32.totalorder %v66, 25
    %vm69 = vmand %vm67, %vm68
    %v70 = vsel %vm69, 1, 0
    %vm71 = vcmp.eq.s32.totalorder %v70, 1
    %v72 = vsel %vm71, %v64, 0.0
    %73 = vadd.xlane.f32.xlu0 %v72
    %v74 = vpop.xlane.xlu0 %73
    %v75 = vmul.f32 %v74, 0.04
    %v76 = vsub.f32 %v64, %v75
    %v77 = vsel %vm71, %v76, 0.0
    %v78 = vmul.f32 %v77, %v77
    %79 = vadd.xlane.f32.xlu0 %v78
    %v80 = vpop.xlane.xlu0 %79
    %v81 = vmul.f32 %v80, 0.04
    %v82 = vadd.f32 %v81, 1e-05
    %v83 = vrsqrt.pop %v82
    %v84 = vmul.f32 %v77, %v83
    %v85 = vadd.f32 %v84, 0.0
    %vm86 = vcmp.ge.s32.totalorder %v66, 25
    %vm87 = vcmp.lt.s32.totalorder %v66, 50
    %vm88 = vmand %vm86, %vm87
    %v89 = vsel %vm88, 1, 0
    %vm90 = vcmp.eq.s32.totalorder %v89, 1
    %v91 = vsel %vm90, %v64, 0.0
    %92 = vadd.xlane.f32.xlu0 %v91
    %v93 = vpop.xlane.xlu0 %92
    %v94 = vmul.f32 %v93, 0.04
    %v95 = vsub.f32 %v64, %v94
    %v96 = vsel %vm90, %v95, 0.0
    %v97 = vmul.f32 %v96, %v96
    %98 = vadd.xlane.f32.xlu0 %v97
    %v99 = vpop.xlane.xlu0 %98
    %v100 = vmul.f32 %v99, 0.04
    %v101 = vadd.f32 %v100, 1e-05
    %v102 = vrsqrt.pop %v101
    %v103 = vmul.f32 %v96, %v102
    %v104 = vadd.f32 %v85, %v103
    %vm105 = vcmp.ge.s32.totalorder %v66, 50
    %vm106 = vcmp.lt.s32.totalorder %v66, 75
    %vm107 = vmand %vm105, %vm106
    %v108 = vsel %vm107, 1, 0
    %vm109 = vcmp.eq.s32.totalorder %v108, 1
    %v110 = vsel %vm109, %v64, 0.0
    %111 = vadd.xlane.f32.xlu0 %v110
    %v112 = vpop.xlane.xlu0 %111
    %v113 = vmul.f32 %v112, 0.04
    %v114 = vsub.f32 %v64, %v113
    %v115 = vsel %vm109, %v114, 0.0
    %v116 = vmul.f32 %v115, %v115
    %117 = vadd.xlane.f32.xlu0 %v116
    %v118 = vpop.xlane.xlu0 %117
    %v119 = vmul.f32 %v118, 0.04
    %v120 = vadd.f32 %v119, 1e-05
    %v121 = vrsqrt.pop %v120
    %v122 = vmul.f32 %v115, %v121
    %v123 = vadd.f32 %v104, %v122
    %v124 = vld [vmem:[%s3] sm:$0xff]
    %v125 = vld [vmem:[#allocation5] sm:$0xff]
    %v126 = vld [vmem:[#allocation5 + $0x8] sm:$0xff]
    %v127 = vld [vmem:[#allocation5 + $0x10] sm:$0xff]
    %v128 = vld [vmem:[#allocation5 + $0x18] sm:$0xff]
    %v129 = vld [vmem:[#allocation5 + $0x20] sm:$0xff]
    %v130 = vld [vmem:[#allocation5 + $0x28] sm:$0xff]
    %v131 = vld [vmem:[#allocation5 + $0x30] sm:$0xff]
    %v132 = vld [vmem:[#allocation5 + $0x38] sm:$0xff]
    %v133 = vld [vmem:[#allocation5 + $0x40] sm:$0xff]
    %v134 = vld [vmem:[#allocation5 + $0x48] sm:$0xff]
    %v135 = vld [vmem:[#allocation5 + $0x50] sm:$0xff]
    %v136 = vld [vmem:[#allocation5 + $0x58] sm:$0xff]
    %v137 = vld [vmem:[#allocation5 + $0x60] sm:$0xff]
    %v138 = vld [vmem:[#allocation5 + $0x68] sm:$0xff]
    %v139 = vld [vmem:[#allocation5 + $0x70] sm:$0xff]
    %v140 = vld [vmem:[#allocation5 + $0x78] sm:$0xff]
    %v141 = vlaneseq
    %v142 = vshrl.u32 %v141, 7
    %v143 = vsub.s32 0, %v142
    %v144 = vrot.slane %v124, %v143
    %145 = vmatprep.subr.mxu0 0.0
    %146 = vmatpush1.msra.mxu0 %v125
    %147 = vmatprep.subr.mxu0 0.0
    %148 = vmatpush1.msra.mxu0 %v126
    %149 = vmatprep.subr.mxu0 0.0
    %150 = vmatpush1.msra.mxu0 %v127
    %151 = vmatprep.subr.mxu0 0.0
    %152 = vmatpush1.msra.mxu0 %v128
    %153 = vmatprep.subr.mxu0 0.0
    %154 = vmatpush1.msra.mxu0 %v129
    %155 = vmatprep.subr.mxu0 0.0
    %156 = vmatpush1.msra.mxu0 %v130
    %157 = vmatprep.subr.mxu0 0.0
    %158 = vmatpush1.msra.mxu0 %v131
    %159 = vmatprep.subr.mxu0 0.0
    %160 = vmatpush1.msra.mxu0 %v132
    %161 = vmatprep.subr.mxu0 0.0
    %162 = vmatpush1.msra.mxu0 %v133
    %163 = vmatprep.subr.mxu0 0.0
    %164 = vmatpush1.msra.mxu0 %v134
    %165 = vmatprep.subr.mxu0 0.0
    %166 = vmatpush1.msra.mxu0 %v135
    %167 = vmatprep.subr.mxu0 0.0
    %168 = vmatpush1.msra.mxu0 %v136
    %169 = vmatprep.subr.mxu0 0.0
    %170 = vmatpush1.msra.mxu0 %v137
    %171 = vmatprep.subr.mxu0 0.0
    %172 = vmatpush1.msra.mxu0 %v138
    %173 = vmatprep.subr.mxu0 0.0
    %174 = vmatpush1.msra.mxu0 %v139
    %175 = vmatprep.subr.mxu0 0.0
    %176 = vmatpush1.msra.mxu0 %v140
    %177 = vmatprep.subr.mxu0 0.0
    %178 = vmatpush1.msra.mxu0 0.0
    %179 = vmatprep.subr.mxu0 0.0
    %180 = vmatpush1.msra.mxu0 0.0
    %181 = vmatprep.subr.mxu0 0.0
    %182 = vmatpush1.msra.mxu0 0.0
    %183 = vmatprep.subr.mxu0 0.0
    %184 = vmatpush1.msra.mxu0 0.0
    %185 = vmatprep.subr.mxu0 0.0
    %186 = vmatpush1.msra.mxu0 0.0
    %187 = vmatprep.subr.mxu0 0.0
    %188 = vmatpush1.msra.mxu0 0.0
    %189 = vmatprep.subr.mxu0 0.0
    %190 = vmatpush1.msra.mxu0 0.0
    %191 = vmatprep.subr.mxu0 0.0
    %192 = vmatpush1.msra.mxu0 0.0
    %193 = vmatprep.subr.mxu0 0.0
    %194 = vmatpush1.msra.mxu0 0.0
    %195 = vmatprep.subr.mxu0 0.0
    %196 = vmatpush1.msra.mxu0 0.0
    %197 = vmatprep.subr.mxu0 0.0
    %198 = vmatpush1.msra.mxu0 0.0
    %199 = vmatprep.subr.mxu0 0.0
    %200 = vmatpush1.msra.mxu0 0.0
    %201 = vmatprep.subr.mxu0 0.0
    %202 = vmatpush1.msra.mxu0 0.0
    %203 = vmatprep.subr.mxu0 0.0
    %204 = vmatpush1.msra.mxu0 0.0
    %205 = vmatprep.subr.mxu0 0.0
    %206 = vmatpush1.msra.mxu0 0.0
    %207 = vmatprep.subr.mxu0 0.0
    %208 = vmatpush1.msra.mxu0 0.0
    %209 = vmatprep.mubr.f32.mxu0 0.0
    %210 = vmatmul.mubr.f32.gmra.mrb[0].mxu0 %v123
    %v211 = vpop.f32.mrb[0].mxu0
    %v212 = vadd.f32 %v144, %v211
    %v213 = vpop.f32.mrb[0].mxu0
    %214 = vdwg.mxu0
    %v215 = vmax.f32 %v212, 0.0
    %v216 = vld [vmem:[#allocation7] sm:$0xff]
    %v217 = vld [vmem:[#allocation7 + $0x8] sm:$0xff]
    %v218 = vld [vmem:[#allocation7 + $0x10] sm:$0xff]
    %v219 = vld [vmem:[#allocation7 + $0x18] sm:$0xff]
    %v220 = vld [vmem:[#allocation7 + $0x20] sm:$0xff]
    %v221 = vld [vmem:[#allocation7 + $0x28] sm:$0xff]
    %v222 = vld [vmem:[#allocation7 + $0x30] sm:$0xff]
    %v223 = vld [vmem:[#allocation7 + $0x38] sm:$0xff]
    %v224 = vld [vmem:[#allocation7 + $0x40] sm:$0xff]
    %v225 = vld [vmem:[#allocation7 + $0x48] sm:$0xff]
    %v226 = vld [vmem:[#allocation7 + $0x50] sm:$0xff]
    %v227 = vld [vmem:[#allocation7 + $0x58] sm:$0xff]
    %v228 = vld [vmem:[#allocation7 + $0x60] sm:$0xff]
    %v229 = vld [vmem:[#allocation7 + $0x68] sm:$0xff]
    %v230 = vld [vmem:[#allocation7 + $0x70] sm:$0xff]
    %v231 = vld [vmem:[#allocation7 + $0x78] sm:$0xff]
    %v232 = vlaneseq
    %v233 = vshrl.u32 %v232, 7
    %v234 = vsub.s32 1, %v233
    %v235 = vrot.slane %v124, %v234
    %236 = vmatprep.subr.mxu0 0.0
    %237 = vmatpush1.msra.mxu0 %v216
    %238 = vmatprep.subr.mxu0 0.0
    %239 = vmatpush1.msra.mxu0 %v217
    %240 = vmatprep.subr.mxu0 0.0
    %241 = vmatpush1.msra.mxu0 %v218
    %242 = vmatprep.subr.mxu0 0.0
    %243 = vmatpush1.msra.mxu0 %v219
    %244 = vmatprep.subr.mxu0 0.0
    %245 = vmatpush1.msra.mxu0 %v220
    %246 = vmatprep.subr.mxu0 0.0
    %247 = vmatpush1.msra.mxu0 %v221
    %248 = vmatprep.subr.mxu0 0.0
    %249 = vmatpush1.msra.mxu0 %v222
    %250 = vmatprep.subr.mxu0 0.0
    %251 = vmatpush1.msra.mxu0 %v223
    %252 = vmatprep.subr.mxu0 0.0
    %253 = vmatpush1.msra.mxu0 %v224
    %254 = vmatprep.subr.mxu0 0.0
    %255 = vmatpush1.msra.mxu0 %v225
    %256 = vmatprep.subr.mxu0 0.0
    %257 = vmatpush1.msra.mxu0 %v226
    %258 = vmatprep.subr.mxu0 0.0
    %259 = vmatpush1.msra.mxu0 %v227
    %260 = vmatprep.subr.mxu0 0.0
    %261 = vmatpush1.msra.mxu0 %v228
    %262 = vmatprep.subr.mxu0 0.0
    %263 = vmatpush1.msra.mxu0 %v229
    %264 = vmatprep.subr.mxu0 0.0
    %265 = vmatpush1.msra.mxu0 %v230
    %266 = vmatprep.subr.mxu0 0.0
    %267 = vmatpush1.msra.mxu0 %v231
    %268 = vmatprep.subr.mxu0 0.0
    %269 = vmatpush1.msra.mxu0 0.0
    %270 = vmatprep.subr.mxu0 0.0
    %271 = vmatpush1.msra.mxu0 0.0
    %272 = vmatprep.subr.mxu0 0.0
    %273 = vmatpush1.msra.mxu0 0.0
    %274 = vmatprep.subr.mxu0 0.0
    %275 = vmatpush1.msra.mxu0 0.0
    %276 = vmatprep.subr.mxu0 0.0
    %277 = vmatpush1.msra.mxu0 0.0
    %278 = vmatprep.subr.mxu0 0.0
    %279 = vmatpush1.msra.mxu0 0.0
    %280 = vmatprep.subr.mxu0 0.0
    %281 = vmatpush1.msra.mxu0 0.0
    %282 = vmatprep.subr.mxu0 0.0
    %283 = vmatpush1.msra.mxu0 0.0
    %284 = vmatprep.subr.mxu0 0.0
    %285 = vmatpush1.msra.mxu0 0.0
    %286 = vmatprep.subr.mxu0 0.0
    %287 = vmatpush1.msra.mxu0 0.0
    %288 = vmatprep.subr.mxu0 0.0
    %289 = vmatpush1.msra.mxu0 0.0
    %290 = vmatprep.subr.mxu0 0.0
    %291 = vmatpush1.msra.mxu0 0.0
    %292 = vmatprep.subr.mxu0 0.0
    %293 = vmatpush1.msra.mxu0 0.0
    %294 = vmatprep.subr.mxu0 0.0
    %295 = vmatpush1.msra.mxu0 0.0
    %296 = vmatprep.subr.mxu0 0.0
    %297 = vmatpush1.msra.mxu0 0.0
    %298 = vmatprep.subr.mxu0 0.0
    %299 = vmatpush1.msra.mxu0 0.0
    %300 = vmatprep.mubr.f32.mxu0 0.0
    %301 = vmatmul.mubr.f32.gmra.mrb[0].mxu0 %v215
    %v302 = vpop.f32.mrb[0].mxu0
    %v303 = vadd.f32 %v235, %v302
    %v304 = vpop.f32.mrb[0].mxu0
    %305 = vdwg.mxu0
    %v306 = vmax.f32 %v303, 0.0
    %s307 = scalar_lea.vmem [#allocation7], 128
    %v308 = vld [vmem:[%s307] sm:$0xff]
    %v309 = vld [vmem:[%s307 + $0x8] sm:$0xff]
    %v310 = vld [vmem:[%s307 + $0x10] sm:$0xff]
    %v311 = vld [vmem:[%s307 + $0x18] sm:$0xff]
    %v312 = vld [vmem:[%s307 + $0x20] sm:$0xff]
    %v313 = vld [vmem:[%s307 + $0x28] sm:$0xff]
    %v314 = vld [vmem:[%s307 + $0x30] sm:$0xff]
    %v315 = vld [vmem:[%s307 + $0x38] sm:$0xff]
    %v316 = vld [vmem:[%s307 + $0x40] sm:$0xff]
    %v317 = vld [vmem:[%s307 + $0x48] sm:$0xff]
    %v318 = vld [vmem:[%s307 + $0x50] sm:$0xff]
    %v319 = vld [vmem:[%s307 + $0x58] sm:$0xff]
    %v320 = vld [vmem:[%s307 + $0x60] sm:$0xff]
    %v321 = vld [vmem:[%s307 + $0x68] sm:$0xff]
    %v322 = vld [vmem:[%s307 + $0x70] sm:$0xff]
    %v323 = vld [vmem:[%s307 + $0x78] sm:$0xff]
    %v324 = vlaneseq
    %v325 = vshrl.u32 %v324, 7
    %v326 = vsub.s32 2, %v325
    %v327 = vrot.slane %v124, %v326
    %328 = vmatprep.subr.mxu0 0.0
    %329 = vmatpush1.msra.mxu0 %v308
    %330 = vmatprep.subr.mxu0 0.0
    %331 = vmatpush1.msra.mxu0 %v309
    %332 = vmatprep.subr.mxu0 0.0
    %333 = vmatpush1.msra.mxu0 %v310
    %334 = vmatprep.subr.mxu0 0.0
    %335 = vmatpush1.msra.mxu0 %v311
    %336 = vmatprep.subr.mxu0 0.0
    %337 = vmatpush1.msra.mxu0 %v312
    %338 = vmatprep.subr.mxu0 0.0
    %339 = vmatpush1.msra.mxu0 %v313
    %340 = vmatprep.subr.mxu0 0.0
    %341 = vmatpush1.msra.mxu0 %v314
    %342 = vmatprep.subr.mxu0 0.0
    %343 = vmatpush1.msra.mxu0 %v315
    %344 = vmatprep.subr.mxu0 0.0
    %345 = vmatpush1.msra.mxu0 %v316
    %346 = vmatprep.subr.mxu0 0.0
    %347 = vmatpush1.msra.mxu0 %v317
    %348 = vmatprep.subr.mxu0 0.0
    %349 = vmatpush1.msra.mxu0 %v318
    %350 = vmatprep.subr.mxu0 0.0
    %351 = vmatpush1.msra.mxu0 %v319
    %352 = vmatprep.subr.mxu0 0.0
    %353 = vmatpush1.msra.mxu0 %v320
    %354 = vmatprep.subr.mxu0 0.0
    %355 = vmatpush1.msra.mxu0 %v321
    %356 = vmatprep.subr.mxu0 0.0
    %357 = vmatpush1.msra.mxu0 %v322
    %358 = vmatprep.subr.mxu0 0.0
    %359 = vmatpush1.msra.mxu0 %v323
    %360 = vmatprep.subr.mxu0 0.0
    %361 = vmatpush1.msra.mxu0 0.0
    %362 = vmatprep.subr.mxu0 0.0
    %363 = vmatpush1.msra.mxu0 0.0
    %364 = vmatprep.subr.mxu0 0.0
    %365 = vmatpush1.msra.mxu0 0.0
    %366 = vmatprep.subr.mxu0 0.0
    %367 = vmatpush1.msra.mxu0 0.0
    %368 = vmatprep.subr.mxu0 0.0
    %369 = vmatpush1.msra.mxu0 0.0
    %370 = vmatprep.subr.mxu0 0.0
    %371 = vmatpush1.msra.mxu0 0.0
    %372 = vmatprep.subr.mxu0 0.0
    %373 = vmatpush1.msra.mxu0 0.0
    %374 = vmatprep.subr.mxu0 0.0
    %375 = vmatpush1.msra.mxu0 0.0
    %376 = vmatprep.subr.mxu0 0.0
    %377 = vmatpush1.msra.mxu0 0.0
    %378 = vmatprep.subr.mxu0 0.0
    %379 = vmatpush1.msra.mxu0 0.0
    %380 = vmatprep.subr.mxu0 0.0
    %381 = vmatpush1.msra.mxu0 0.0
    %382 = vmatprep.subr.mxu0 0.0
    %383 = vmatpush1.msra.mxu0 0.0
    %384 = vmatprep.subr.mxu0 0.0
    %385 = vmatpush1.msra.mxu0 0.0
    %386 = vmatprep.subr.mxu0 0.0
    %387 = vmatpush1.msra.mxu0 0.0
    %388 = vmatprep.subr.mxu0 0.0
    %389 = vmatpush1.msra.mxu0 0.0
    %390 = vmatprep.subr.mxu0 0.0
    %391 = vmatpush1.msra.mxu0 0.0
    %392 = vmatprep.mubr.f32.mxu0 0.0
    %393 = vmatmul.mubr.f32.gmra.mrb[0].mxu0 %v306
    %v394 = vpop.f32.mrb[0].mxu0
    %v395 = vadd.f32 %v327, %v394
    %v396 = vpop.f32.mrb[0].mxu0
    %397 = vdwg.mxu0
    %v398 = vmax.f32 %v395, 0.0
    %s399 = scalar_lea.vmem [#allocation7], 256
    %v400 = vld [vmem:[%s399] sm:$0xff]
    %v401 = vld [vmem:[%s399 + $0x8] sm:$0xff]
    %v402 = vld [vmem:[%s399 + $0x10] sm:$0xff]
    %v403 = vld [vmem:[%s399 + $0x18] sm:$0xff]
    %v404 = vld [vmem:[%s399 + $0x20] sm:$0xff]
    %v405 = vld [vmem:[%s399 + $0x28] sm:$0xff]
    %v406 = vld [vmem:[%s399 + $0x30] sm:$0xff]
    %v407 = vld [vmem:[%s399 + $0x38] sm:$0xff]
    %v408 = vld [vmem:[%s399 + $0x40] sm:$0xff]
    %v409 = vld [vmem:[%s399 + $0x48] sm:$0xff]
    %v410 = vld [vmem:[%s399 + $0x50] sm:$0xff]
    %v411 = vld [vmem:[%s399 + $0x58] sm:$0xff]
    %v412 = vld [vmem:[%s399 + $0x60] sm:$0xff]
    %v413 = vld [vmem:[%s399 + $0x68] sm:$0xff]
    %v414 = vld [vmem:[%s399 + $0x70] sm:$0xff]
    %v415 = vld [vmem:[%s399 + $0x78] sm:$0xff]
    %v416 = vlaneseq
    %v417 = vshrl.u32 %v416, 7
    %v418 = vsub.s32 3, %v417
    %v419 = vrot.slane %v124, %v418
    %420 = vmatprep.subr.mxu0 0.0
    %421 = vmatpush1.msra.mxu0 %v400
    %422 = vmatprep.subr.mxu0 0.0
    %423 = vmatpush1.msra.mxu0 %v401
    %424 = vmatprep.subr.mxu0 0.0
    %425 = vmatpush1.msra.mxu0 %v402
    %426 = vmatprep.subr.mxu0 0.0
    %427 = vmatpush1.msra.mxu0 %v403
    %428 = vmatprep.subr.mxu0 0.0
    %429 = vmatpush1.msra.mxu0 %v404
    %430 = vmatprep.subr.mxu0 0.0
    %431 = vmatpush1.msra.mxu0 %v405
    %432 = vmatprep.subr.mxu0 0.0
    %433 = vmatpush1.msra.mxu0 %v406
    %434 = vmatprep.subr.mxu0 0.0
    %435 = vmatpush1.msra.mxu0 %v407
    %436 = vmatprep.subr.mxu0 0.0
    %437 = vmatpush1.msra.mxu0 %v408
    %438 = vmatprep.subr.mxu0 0.0
    %439 = vmatpush1.msra.mxu0 %v409
    %440 = vmatprep.subr.mxu0 0.0
    %441 = vmatpush1.msra.mxu0 %v410
    %442 = vmatprep.subr.mxu0 0.0
    %443 = vmatpush1.msra.mxu0 %v411
    %444 = vmatprep.subr.mxu0 0.0
    %445 = vmatpush1.msra.mxu0 %v412
    %446 = vmatprep.subr.mxu0 0.0
    %447 = vmatpush1.msra.mxu0 %v413
    %448 = vmatprep.subr.mxu0 0.0
    %449 = vmatpush1.msra.mxu0 %v414
    %450 = vmatprep.subr.mxu0 0.0
    %451 = vmatpush1.msra.mxu0 %v415
    %452 = vmatprep.subr.mxu0 0.0
    %453 = vmatpush1.msra.mxu0 0.0
    %454 = vmatprep.subr.mxu0 0.0
    %455 = vmatpush1.msra.mxu0 0.0
    %456 = vmatprep.subr.mxu0 0.0
    %457 = vmatpush1.msra.mxu0 0.0
    %458 = vmatprep.subr.mxu0 0.0
    %459 = vmatpush1.msra.mxu0 0.0
    %460 = vmatprep.subr.mxu0 0.0
    %461 = vmatpush1.msra.mxu0 0.0
    %462 = vmatprep.subr.mxu0 0.0
    %463 = vmatpush1.msra.mxu0 0.0
    %464 = vmatprep.subr.mxu0 0.0
    %465 = vmatpush1.msra.mxu0 0.0
    %466 = vmatprep.subr.mxu0 0.0
    %467 = vmatpush1.msra.mxu0 0.0
    %468 = vmatprep.subr.mxu0 0.0
    %469 = vmatpush1.msra.mxu0 0.0
    %470 = vmatprep.subr.mxu0 0.0
    %471 = vmatpush1.msra.mxu0 0.0
    %472 = vmatprep.subr.mxu0 0.0
    %473 = vmatpush1.msra.mxu0 0.0
    %474 = vmatprep.subr.mxu0 0.0
    %475 = vmatpush1.msra.mxu0 0.0
    %476 = vmatprep.subr.mxu0 0.0
    %477 = vmatpush1.msra.mxu0 0.0
    %478 = vmatprep.subr.mxu0 0.0
    %479 = vmatpush1.msra.mxu0 0.0
    %480 = vmatprep.subr.mxu0 0.0
    %481 = vmatpush1.msra.mxu0 0.0
    %482 = vmatprep.subr.mxu0 0.0
    %483 = vmatpush1.msra.mxu0 0.0
    %484 = vmatprep.mubr.f32.mxu0 0.0
    %485 = vmatmul.mubr.f32.gmra.mrb[0].mxu0 %v398
    %v486 = vpop.f32.mrb[0].mxu0
    %v487 = vadd.f32 %v419, %v486
    %v488 = vpop.f32.mrb[0].mxu0
    %489 = vdwg.mxu0
    %v490 = vmax.f32 %v487, 0.0
    %s491 = scalar_lea.vmem [#allocation7], 384
    %v492 = vld [vmem:[%s491] sm:$0xff]
    %v493 = vld [vmem:[%s491 + $0x8] sm:$0xff]
    %v494 = vld [vmem:[%s491 + $0x10] sm:$0xff]
    %v495 = vld [vmem:[%s491 + $0x18] sm:$0xff]
    %v496 = vld [vmem:[%s491 + $0x20] sm:$0xff]
    %v497 = vld [vmem:[%s491 + $0x28] sm:$0xff]
    %v498 = vld [vmem:[%s491 + $0x30] sm:$0xff]
    %v499 = vld [vmem:[%s491 + $0x38] sm:$0xff]
    %v500 = vld [vmem:[%s491 + $0x40] sm:$0xff]
    %v501 = vld [vmem:[%s491 + $0x48] sm:$0xff]
    %v502 = vld [vmem:[%s491 + $0x50] sm:$0xff]
    %v503 = vld [vmem:[%s491 + $0x58] sm:$0xff]
    %v504 = vld [vmem:[%s491 + $0x60] sm:$0xff]
    %v505 = vld [vmem:[%s491 + $0x68] sm:$0xff]
    %v506 = vld [vmem:[%s491 + $0x70] sm:$0xff]
    %v507 = vld [vmem:[%s491 + $0x78] sm:$0xff]
    %v508 = vlaneseq
    %v509 = vshrl.u32 %v508, 7
    %v510 = vsub.s32 4, %v509
    %v511 = vrot.slane %v124, %v510
    %512 = vmatprep.subr.mxu0 0.0
    %513 = vmatpush1.msra.mxu0 %v492
    %514 = vmatprep.subr.mxu0 0.0
    %515 = vmatpush1.msra.mxu0 %v493
    %516 = vmatprep.subr.mxu0 0.0
    %517 = vmatpush1.msra.mxu0 %v494
    %518 = vmatprep.subr.mxu0 0.0
    %519 = vmatpush1.msra.mxu0 %v495
    %520 = vmatprep.subr.mxu0 0.0
    %521 = vmatpush1.msra.mxu0 %v496
    %522 = vmatprep.subr.mxu0 0.0
    %523 = vmatpush1.msra.mxu0 %v497
    %524 = vmatprep.subr.mxu0 0.0
    %525 = vmatpush1.msra.mxu0 %v498
    %526 = vmatprep.subr.mxu0 0.0
    %527 = vmatpush1.msra.mxu0 %v499
    %528 = vmatprep.subr.mxu0 0.0
    %529 = vmatpush1.msra.mxu0 %v500
    %530 = vmatprep.subr.mxu0 0.0
    %531 = vmatpush1.msra.mxu0 %v501
    %532 = vmatprep.subr.mxu0 0.0
    %533 = vmatpush1.msra.mxu0 %v502
    %534 = vmatprep.subr.mxu0 0.0
    %535 = vmatpush1.msra.mxu0 %v503
    %536 = vmatprep.subr.mxu0 0.0
    %537 = vmatpush1.msra.mxu0 %v504
    %538 = vmatprep.subr.mxu0 0.0
    %539 = vmatpush1.msra.mxu0 %v505
    %540 = vmatprep.subr.mxu0 0.0
    %541 = vmatpush1.msra.mxu0 %v506
    %542 = vmatprep.subr.mxu0 0.0
    %543 = vmatpush1.msra.mxu0 %v507
    %544 = vmatprep.subr.mxu0 0.0
    %545 = vmatpush1.msra.mxu0 0.0
    %546 = vmatprep.subr.mxu0 0.0
    %547 = vmatpush1.msra.mxu0 0.0
    %548 = vmatprep.subr.mxu0 0.0
    %549 = vmatpush1.msra.mxu0 0.0
    %550 = vmatprep.subr.mxu0 0.0
    %551 = vmatpush1.msra.mxu0 0.0
    %552 = vmatprep.subr.mxu0 0.0
    %553 = vmatpush1.msra.mxu0 0.0
    %554 = vmatprep.subr.mxu0 0.0
    %555 = vmatpush1.msra.mxu0 0.0
    %556 = vmatprep.subr.mxu0 0.0
    %557 = vmatpush1.msra.mxu0 0.0
    %558 = vmatprep.subr.mxu0 0.0
    %559 = vmatpush1.msra.mxu0 0.0
    %560 = vmatprep.subr.mxu0 0.0
    %561 = vmatpush1.msra.mxu0 0.0
    %562 = vmatprep.subr.mxu0 0.0
    %563 = vmatpush1.msra.mxu0 0.0
    %564 = vmatprep.subr.mxu0 0.0
    %565 = vmatpush1.msra.mxu0 0.0
    %566 = vmatprep.subr.mxu0 0.0
    %567 = vmatpush1.msra.mxu0 0.0
    %568 = vmatprep.subr.mxu0 0.0
    %569 = vmatpush1.msra.mxu0 0.0
    %570 = vmatprep.subr.mxu0 0.0
    %571 = vmatpush1.msra.mxu0 0.0
    %572 = vmatprep.subr.mxu0 0.0
    %573 = vmatpush1.msra.mxu0 0.0
    %574 = vmatprep.subr.mxu0 0.0
    %575 = vmatpush1.msra.mxu0 0.0
    %576 = vmatprep.mubr.f32.mxu0 0.0
    %577 = vmatmul.mubr.f32.gmra.mrb[0].mxu0 %v490
    %v578 = vpop.f32.mrb[0].mxu0
    %v579 = vadd.f32 %v511, %v578
    %v580 = vpop.f32.mrb[0].mxu0
    %581 = vdwg.mxu0
    %v582 = vmax.f32 %v579, 0.0
    %s583 = scalar_lea.vmem [#allocation7], 512
    %v584 = vld [vmem:[%s583] sm:$0xff]
    %v585 = vld [vmem:[%s583 + $0x8] sm:$0xff]
    %v586 = vld [vmem:[%s583 + $0x10] sm:$0xff]
    %v587 = vld [vmem:[%s583 + $0x18] sm:$0xff]
    %v588 = vld [vmem:[%s583 + $0x20] sm:$0xff]
    %v589 = vld [vmem:[%s583 + $0x28] sm:$0xff]
    %v590 = vld [vmem:[%s583 + $0x30] sm:$0xff]
    %v591 = vld [vmem:[%s583 + $0x38] sm:$0xff]
    %v592 = vld [vmem:[%s583 + $0x40] sm:$0xff]
    %v593 = vld [vmem:[%s583 + $0x48] sm:$0xff]
    %v594 = vld [vmem:[%s583 + $0x50] sm:$0xff]
    %v595 = vld [vmem:[%s583 + $0x58] sm:$0xff]
    %v596 = vld [vmem:[%s583 + $0x60] sm:$0xff]
    %v597 = vld [vmem:[%s583 + $0x68] sm:$0xff]
    %v598 = vld [vmem:[%s583 + $0x70] sm:$0xff]
    %v599 = vld [vmem:[%s583 + $0x78] sm:$0xff]
    %v600 = vlaneseq
    %v601 = vshrl.u32 %v600, 7
    %v602 = vsub.s32 5, %v601
    %v603 = vrot.slane %v124, %v602
    %604 = vmatprep.subr.mxu0 0.0
    %605 = vmatpush1.msra.mxu0 %v584
    %606 = vmatprep.subr.mxu0 0.0
    %607 = vmatpush1.msra.mxu0 %v585
    %608 = vmatprep.subr.mxu0 0.0
    %609 = vmatpush1.msra.mxu0 %v586
    %610 = vmatprep.subr.mxu0 0.0
    %611 = vmatpush1.msra.mxu0 %v587
    %612 = vmatprep.subr.mxu0 0.0
    %613 = vmatpush1.msra.mxu0 %v588
    %614 = vmatprep.subr.mxu0 0.0
    %615 = vmatpush1.msra.mxu0 %v589
    %616 = vmatprep.subr.mxu0 0.0
    %617 = vmatpush1.msra.mxu0 %v590
    %618 = vmatprep.subr.mxu0 0.0
    %619 = vmatpush1.msra.mxu0 %v591
    %620 = vmatprep.subr.mxu0 0.0
    %621 = vmatpush1.msra.mxu0 %v592
    %622 = vmatprep.subr.mxu0 0.0
    %623 = vmatpush1.msra.mxu0 %v593
    %624 = vmatprep.subr.mxu0 0.0
    %625 = vmatpush1.msra.mxu0 %v594
    %626 = vmatprep.subr.mxu0 0.0
    %627 = vmatpush1.msra.mxu0 %v595
    %628 = vmatprep.subr.mxu0 0.0
    %629 = vmatpush1.msra.mxu0 %v596
    %630 = vmatprep.subr.mxu0 0.0
    %631 = vmatpush1.msra.mxu0 %v597
    %632 = vmatprep.subr.mxu0 0.0
    %633 = vmatpush1.msra.mxu0 %v598
    %634 = vmatprep.subr.mxu0 0.0
    %635 = vmatpush1.msra.mxu0 %v599
    %636 = vmatprep.subr.mxu0 0.0
    %637 = vmatpush1.msra.mxu0 0.0
    %638 = vmatprep.subr.mxu0 0.0
    %639 = vmatpush1.msra.mxu0 0.0
    %640 = vmatprep.subr.mxu0 0.0
    %641 = vmatpush1.msra.mxu0 0.0
    %642 = vmatprep.subr.mxu0 0.0
    %643 = vmatpush1.msra.mxu0 0.0
    %644 = vmatprep.subr.mxu0 0.0
    %645 = vmatpush1.msra.mxu0 0.0
    %646 = vmatprep.subr.mxu0 0.0
    %647 = vmatpush1.msra.mxu0 0.0
    %648 = vmatprep.subr.mxu0 0.0
    %649 = vmatpush1.msra.mxu0 0.0
    %650 = vmatprep.subr.mxu0 0.0
    %651 = vmatpush1.msra.mxu0 0.0
    %652 = vmatprep.subr.mxu0 0.0
    %653 = vmatpush1.msra.mxu0 0.0
    %654 = vmatprep.subr.mxu0 0.0
    %655 = vmatpush1.msra.mxu0 0.0
    %656 = vmatprep.subr.mxu0 0.0
    %657 = vmatpush1.msra.mxu0 0.0
    %658 = vmatprep.subr.mxu0 0.0
    %659 = vmatpush1.msra.mxu0 0.0
    %660 = vmatprep.subr.mxu0 0.0
    %661 = vmatpush1.msra.mxu0 0.0
    %662 = vmatprep.subr.mxu0 0.0
    %663 = vmatpush1.msra.mxu0 0.0
    %664 = vmatprep.subr.mxu0 0.0
    %665 = vmatpush1.msra.mxu0 0.0
    %666 = vmatprep.subr.mxu0 0.0
    %667 = vmatpush1.msra.mxu0 0.0
    %668 = vmatprep.mubr.f32.mxu0 0.0
    %669 = vmatmul.mubr.f32.gmra.mrb[0].mxu0 %v582
    %v670 = vpop.f32.mrb[0].mxu0
    %v671 = vadd.f32 %v603, %v670
    %v672 = vpop.f32.mrb[0].mxu0
    %673 = vdwg.mxu0
    %v674 = vmax.f32 %v671, 0.0
    %s675 = scalar_lea.vmem [#allocation7], 640
    %v676 = vld [vmem:[%s675] sm:$0xff]
    %v677 = vld [vmem:[%s675 + $0x8] sm:$0xff]
    %v678 = vld [vmem:[%s675 + $0x10] sm:$0xff]
    %v679 = vld [vmem:[%s675 + $0x18] sm:$0xff]
    %v680 = vld [vmem:[%s675 + $0x20] sm:$0xff]
    %v681 = vld [vmem:[%s675 + $0x28] sm:$0xff]
    %v682 = vld [vmem:[%s675 + $0x30] sm:$0xff]
    %v683 = vld [vmem:[%s675 + $0x38] sm:$0xff]
    %v684 = vld [vmem:[%s675 + $0x40] sm:$0xff]
    %v685 = vld [vmem:[%s675 + $0x48] sm:$0xff]
    %v686 = vld [vmem:[%s675 + $0x50] sm:$0xff]
    %v687 = vld [vmem:[%s675 + $0x58] sm:$0xff]
    %v688 = vld [vmem:[%s675 + $0x60] sm:$0xff]
    %v689 = vld [vmem:[%s675 + $0x68] sm:$0xff]
    %v690 = vld [vmem:[%s675 + $0x70] sm:$0xff]
    %v691 = vld [vmem:[%s675 + $0x78] sm:$0xff]
    %v692 = vlaneseq
    %v693 = vshrl.u32 %v692, 7
    %v694 = vsub.s32 6, %v693
    %v695 = vrot.slane %v124, %v694
    %696 = vmatprep.subr.mxu0 0.0
    %697 = vmatpush1.msra.mxu0 %v676
    %698 = vmatprep.subr.mxu0 0.0
    %699 = vmatpush1.msra.mxu0 %v677
    %700 = vmatprep.subr.mxu0 0.0
    %701 = vmatpush1.msra.mxu0 %v678
    %702 = vmatprep.subr.mxu0 0.0
    %703 = vmatpush1.msra.mxu0 %v679
    %704 = vmatprep.subr.mxu0 0.0
    %705 = vmatpush1.msra.mxu0 %v680
    %706 = vmatprep.subr.mxu0 0.0
    %707 = vmatpush1.msra.mxu0 %v681
    %708 = vmatprep.subr.mxu0 0.0
    %709 = vmatpush1.msra.mxu0 %v682
    %710 = vmatprep.subr.mxu0 0.0
    %711 = vmatpush1.msra.mxu0 %v683
    %712 = vmatprep.subr.mxu0 0.0
    %713 = vmatpush1.msra.mxu0 %v684
    %714 = vmatprep.subr.mxu0 0.0
    %715 = vmatpush1.msra.mxu0 %v685
    %716 = vmatprep.subr.mxu0 0.0
    %717 = vmatpush1.msra.mxu0 %v686
    %718 = vmatprep.subr.mxu0 0.0
    %719 = vmatpush1.msra.mxu0 %v687
    %720 = vmatprep.subr.mxu0 0.0
    %721 = vmatpush1.msra.mxu0 %v688
    %722 = vmatprep.subr.mxu0 0.0
    %723 = vmatpush1.msra.mxu0 %v689
    %724 = vmatprep.subr.mxu0 0.0
    %725 = vmatpush1.msra.mxu0 %v690
    %726 = vmatprep.subr.mxu0 0.0
    %727 = vmatpush1.msra.mxu0 %v691
    %728 = vmatprep.subr.mxu0 0.0
    %729 = vmatpush1.msra.mxu0 0.0
    %730 = vmatprep.subr.mxu0 0.0
    %731 = vmatpush1.msra.mxu0 0.0
    %732 = vmatprep.subr.mxu0 0.0
    %733 = vmatpush1.msra.mxu0 0.0
    %734 = vmatprep.subr.mxu0 0.0
    %735 = vmatpush1.msra.mxu0 0.0
    %736 = vmatprep.subr.mxu0 0.0
    %737 = vmatpush1.msra.mxu0 0.0
    %738 = vmatprep.subr.mxu0 0.0
    %739 = vmatpush1.msra.mxu0 0.0
    %740 = vmatprep.subr.mxu0 0.0
    %741 = vmatpush1.msra.mxu0 0.0
    %742 = vmatprep.subr.mxu0 0.0
    %743 = vmatpush1.msra.mxu0 0.0
    %744 = vmatprep.subr.mxu0 0.0
    %745 = vmatpush1.msra.mxu0 0.0
    %746 = vmatprep.subr.mxu0 0.0
    %747 = vmatpush1.msra.mxu0 0.0
    %748 = vmatprep.subr.mxu0 0.0
    %749 = vmatpush1.msra.mxu0 0.0
    %750 = vmatprep.subr.mxu0 0.0
    %751 = vmatpush1.msra.mxu0 0.0
    %752 = vmatprep.subr.mxu0 0.0
    %753 = vmatpush1.msra.mxu0 0.0
    %754 = vmatprep.subr.mxu0 0.0
    %755 = vmatpush1.msra.mxu0 0.0
    %756 = vmatprep.subr.mxu0 0.0
    %757 = vmatpush1.msra.mxu0 0.0
    %758 = vmatprep.subr.mxu0 0.0
    %759 = vmatpush1.msra.mxu0 0.0
    %760 = vmatprep.mubr.f32.mxu0 0.0
    %761 = vmatmul.mubr.f32.gmra.mrb[0].mxu0 %v674
    %v762 = vpop.f32.mrb[0].mxu0
    %v763 = vadd.f32 %v695, %v762
    %v764 = vpop.f32.mrb[0].mxu0
    %765 = vdwg.mxu0
    %v766 = vmax.f32 %v763, 0.0
    %s767 = scalar_lea.vmem [#allocation7], 768
    %v768 = vld [vmem:[%s767] sm:$0xff]
    %v769 = vld [vmem:[%s767 + $0x8] sm:$0xff]
    %v770 = vld [vmem:[%s767 + $0x10] sm:$0xff]
    %v771 = vld [vmem:[%s767 + $0x18] sm:$0xff]
    %v772 = vld [vmem:[%s767 + $0x20] sm:$0xff]
    %v773 = vld [vmem:[%s767 + $0x28] sm:$0xff]
    %v774 = vld [vmem:[%s767 + $0x30] sm:$0xff]
    %v775 = vld [vmem:[%s767 + $0x38] sm:$0xff]
    %v776 = vld [vmem:[%s767 + $0x40] sm:$0xff]
    %v777 = vld [vmem:[%s767 + $0x48] sm:$0xff]
    %v778 = vld [vmem:[%s767 + $0x50] sm:$0xff]
    %v779 = vld [vmem:[%s767 + $0x58] sm:$0xff]
    %v780 = vld [vmem:[%s767 + $0x60] sm:$0xff]
    %v781 = vld [vmem:[%s767 + $0x68] sm:$0xff]
    %v782 = vld [vmem:[%s767 + $0x70] sm:$0xff]
    %v783 = vld [vmem:[%s767 + $0x78] sm:$0xff]
    %v784 = vlaneseq
    %v785 = vshrl.u32 %v784, 7
    %v786 = vsub.s32 7, %v785
    %v787 = vrot.slane %v124, %v786
    %788 = vmatprep.subr.mxu0 0.0
    %789 = vmatpush1.msra.mxu0 %v768
    %790 = vmatprep.subr.mxu0 0.0
    %791 = vmatpush1.msra.mxu0 %v769
    %792 = vmatprep.subr.mxu0 0.0
    %793 = vmatpush1.msra.mxu0 %v770
    %794 = vmatprep.subr.mxu0 0.0
    %795 = vmatpush1.msra.mxu0 %v771
    %796 = vmatprep.subr.mxu0 0.0
    %797 = vmatpush1.msra.mxu0 %v772
    %798 = vmatprep.subr.mxu0 0.0
    %799 = vmatpush1.msra.mxu0 %v773
    %800 = vmatprep.subr.mxu0 0.0
    %801 = vmatpush1.msra.mxu0 %v774
    %802 = vmatprep.subr.mxu0 0.0
    %803 = vmatpush1.msra.mxu0 %v775
    %804 = vmatprep.subr.mxu0 0.0
    %805 = vmatpush1.msra.mxu0 %v776
    %806 = vmatprep.subr.mxu0 0.0
    %807 = vmatpush1.msra.mxu0 %v777
    %808 = vmatprep.subr.mxu0 0.0
    %809 = vmatpush1.msra.mxu0 %v778
    %810 = vmatprep.subr.mxu0 0.0
    %811 = vmatpush1.msra.mxu0 %v779
    %812 = vmatprep.subr.mxu0 0.0
    %813 = vmatpush1.msra.mxu0 %v780
    %814 = vmatprep.subr.mxu0 0.0
    %815 = vmatpush1.msra.mxu0 %v781
    %816 = vmatprep.subr.mxu0 0.0
    %817 = vmatpush1.msra.mxu0 %v782
    %818 = vmatprep.subr.mxu0 0.0
    %819 = vmatpush1.msra.mxu0 %v783
    %820 = vmatprep.subr.mxu0 0.0
    %821 = vmatpush1.msra.mxu0 0.0
    %822 = vmatprep.subr.mxu0 0.0
    %823 = vmatpush1.msra.mxu0 0.0
    %824 = vmatprep.subr.mxu0 0.0
    %825 = vmatpush1.msra.mxu0 0.0
    %826 = vmatprep.subr.mxu0 0.0
    %827 = vmatpush1.msra.mxu0 0.0
    %828 = vmatprep.subr.mxu0 0.0
    %829 = vmatpush1.msra.mxu0 0.0
    %830 = vmatprep.subr.mxu0 0.0
    %831 = vmatpush1.msra.mxu0 0.0
    %832 = vmatprep.subr.mxu0 0.0
    %833 = vmatpush1.msra.mxu0 0.0
    %834 = vmatprep.subr.mxu0 0.0
    %835 = vmatpush1.msra.mxu0 0.0
    %836 = vmatprep.subr.mxu0 0.0
    %837 = vmatpush1.msra.mxu0 0.0
    %838 = vmatprep.subr.mxu0 0.0
    %839 = vmatpush1.msra.mxu0 0.0
    %840 = vmatprep.subr.mxu0 0.0
    %841 = vmatpush1.msra.mxu0 0.0
    %842 = vmatprep.subr.mxu0 0.0
    %843 = vmatpush1.msra.mxu0 0.0
    %844 = vmatprep.subr.mxu0 0.0
    %845 = vmatpush1.msra.mxu0 0.0
    %846 = vmatprep.subr.mxu0 0.0
    %847 = vmatpush1.msra.mxu0 0.0
    %848 = vmatprep.subr.mxu0 0.0
    %849 = vmatpush1.msra.mxu0 0.0
    %850 = vmatprep.subr.mxu0 0.0
    %851 = vmatpush1.msra.mxu0 0.0
    %852 = vmatprep.mubr.f32.mxu0 0.0
    %853 = vmatmul.mubr.f32.gmra.mrb[0].mxu0 %v766
    %v854 = vpop.f32.mrb[0].mxu0
    %v855 = vadd.f32 %v787, %v854
    %v856 = vpop.f32.mrb[0].mxu0
    %857 = vdwg.mxu0
    %v858 = vmax.f32 %v855, 0.0
    %v859 = vld [vmem:[%s4] sm:$0x1]
    %v861 = vlaneseq
    %v862 = vshrl.u32 %v861, 7
    %v863 = vsub.s32 0, %v862
    %v864 = vrot.slane %v859, %v863
    %v866 = vmul.f32 %v858, %v864
    %867 = vadd.xlane.f32.xlu0 %v866
    %v868 = vpop.xlane.xlu0 %867
    %v869 = vld [vmem:[#allocation2] sm:$0x1]
    %v871 = vlaneseq
    %v872 = vshrl.u32 %v871, 7
    %v873 = vsub.s32 0, %v872
    %v874 = vrot.slane %v869, %v873
    %v876 = vadd.f32 %v868, %v874
    %vm877 = vcmask 7168
    %878 = vst.msk [vmem:[%s6] sm:$0xff] %vm877, %v876
    // Predicated region
    $region38: #{tpu_custom_call.1} parent=1 // pred_check
      _
    $region39: #{tpu_custom_call.1} parent=1 // pred_check_branch
      %880 = sbr.rel (0) target = $region41
    $region40: #{tpu_custom_call.1} parent=1 // pred_region
      _
    $region41: #{tpu_custom_call.1} parent=1 // pred_fallthru
      _
    // Predicated region
    $region42: #{tpu_custom_call.1} parent=1 // pred_check
      _
    $region43: #{tpu_custom_call.1} parent=1 // pred_check_branch
      %882 = sbr.rel (0) target = $region45
    $region44: #{tpu_custom_call.1} parent=1 // pred_region
      _
    $region45: #{tpu_custom_call.1} parent=1 // pred_fallthru
      _
    %883 = vsyncpa [#allocation4], 1
    %884 = vsyncpa [#allocation6], 1

</llo_original>
